<compile_context>
chip_gen: v7x
topology: tpu7x:2x2x1
jax: 0.10.0
libtpu: 0.0.40
codegen_flags: <defaults>
</compile_context>

<pallas_src>
import jax
import jax.numpy as jnp
from jax.experimental import pallas as pl
from jax.experimental.pallas import tpu as pltpu


def _round_up(x, m):
    return ((x + m - 1) // m) * m


def _cdiv(a, b):
    return -(-a // b)


# ----------------------------------------------------------------------------
# Kernel: grid = (batch tiles, K tiles), K last ("arbitrary"), batch "parallel".
# Output block index depends only on i, so o_ref is the resident accumulator.
# ----------------------------------------------------------------------------
def lr_kernel(x_ref, w_ref, b_ref, o_ref):
    k = pl.program_id(1)

    @pl.when(k == 0)
    def _():
        # Initialize the resident output tile with the broadcast bias
        # (bias add folded into the required init store).
        o_ref[...] = jnp.broadcast_to(b_ref[...], o_ref.shape).astype(o_ref.dtype)

    # (TM, TK) @ (TK, D_out_pad) -> (TM, D_out_pad); RHS already (K, N) so the
    # contraction is MXU-native (no per-tile transpose), f32 accumulation.
    o_ref[...] += jnp.dot(x_ref[...], w_ref[...],
                          preferred_element_type=jnp.float32)

    @pl.when(k == pl.num_programs(1) - 1)
    def _():
        z = o_ref[...]
        # sigmoid(z) = 1 / (1 + exp(-z)); exp + approx reciprocal both run on
        # the EUP slot, keeping the VALU free.
        o_ref[...] = pl.reciprocal(1.0 + jnp.exp(-z), approx=True)


# ----------------------------------------------------------------------------
# One-time parameter preparation (call at model-load time, NOT per forward).
# ----------------------------------------------------------------------------
def prepare_lr_params(weight, bias, *, compute_dtype=jnp.float32):
    """weight: (D_out, D_in) PyTorch layout, bias: (D_out,).

    Returns (w_t_padded, bias_padded, d_out):
      w_t_padded: (d_in_pad, d_out_pad) -- transposed + zero-padded
      bias_padded: (1, d_out_pad) float32
    Set compute_dtype=jnp.bfloat16 on v6e/v7x if the model tolerates it
    (accumulation stays float32 in the kernel).
    """
    D_out, D_in = weight.shape
    d_in_pad = _round_up(D_in, 128)
    # 256-wide N tiles feed the v6e/v7x 256x256 MXU better; keep 128 for tiny D_out.
    d_out_pad = _round_up(D_out, 256) if D_out >= 256 else _round_up(D_out, 128)
    w_t = jnp.pad(weight.T.astype(compute_dtype),
                  ((0, d_in_pad - D_in), (0, d_out_pad - D_out)))
    b_p = jnp.pad(bias.astype(jnp.float32),
                  (0, d_out_pad - D_out)).reshape(1, d_out_pad)
    return w_t, b_p, D_out


def _choose_tiles(B, d_in_pad, d_out_pad, in_itemsize, vmem_budget,
                  tm_target=256, tk_target=512):
    # Batch tile: multiple of 8, capped by target; ensure >= 2 tiles when
    # possible so the "parallel" axis shards across both v7x TensorCores.
    TM = min(tm_target, _round_up(B, 8))
    if _cdiv(B, TM) < 2 and B > 8:
        TM = _round_up(_cdiv(B, 2), 8)

    def bytes_needed(tm, tk):
        return (2 * tm * tk * in_itemsize            # x tiles (double-buffered)
                + 2 * tk * d_out_pad * in_itemsize   # weight tiles
                + 2 * d_out_pad * 4                  # bias
                + 2 * tm * d_out_pad * 4)            # resident f32 output tiles

    # Prefer the whole (padded) K in one block: weight is then fetched once
    # from HBM and stays resident across every batch tile.
    TK = d_in_pad
    if bytes_needed(TM, TK) > vmem_budget:
        # Fall back to tiled K: largest 128-multiple divisor of d_in_pad that
        # fits the budget and is <= tk_target (divisor => no garbage K tail).
        TK = 128
        for t in range(128, min(tk_target, d_in_pad) + 1, 128):
            if d_in_pad % t == 0 and bytes_needed(TM, t) <= vmem_budget:
                TK = t
    # Last resort: shrink the batch tile.
    while bytes_needed(TM, TK) > vmem_budget and TM > 8:
        TM = max(8, _round_up(TM // 2, 8))
    return TM, TK, bytes_needed(TM, TK)


# ----------------------------------------------------------------------------
# Forward pass: sigmoid(x @ W.T + b), taking pre-prepared (padded) parameters.
# ----------------------------------------------------------------------------
def lr_forward(x, w_t_padded, b_padded, d_out, *, tm_target=256, tk_target=512):
    B, D_in = x.shape
    d_in_pad, d_out_pad = w_t_padded.shape
    compute_dtype = w_t_padded.dtype
    in_itemsize = jnp.dtype(compute_dtype).itemsize

    # VMEM budget from the actual part (64 MiB/TC on v7x, 128 MiB on v5e/v6e);
    # explicit vmem_limit is mandatory on v5e (default scoped limit is 16 MiB).
    try:
        vmem_cap = pltpu.get_tpu_info().vmem_capacity_bytes
    except Exception:  # pragma: no cover - conservative fallback
        vmem_cap = 64 * 1024 * 1024
    vmem_budget = int(vmem_cap * 0.75)

    TM, TK, needed = _choose_tiles(B, d_in_pad, d_out_pad, in_itemsize,
                                   vmem_budget, tm_target, tk_target)
    grid = (_cdiv(B, TM), d_in_pad // TK)

    # Only the K dim of x is padded (zeros), so OOB-K never contaminates the
    # accumulation; the batch dim uses partial blocks (masked stores) instead.
    x_c = x.astype(compute_dtype)
    x_p = x_c if D_in == d_in_pad else jnp.pad(x_c, ((0, 0), (0, d_in_pad - D_in)))

    vmem_limit = min(int(vmem_cap * 0.85),
                     max(needed + (4 << 20), 32 * 1024 * 1024))

    cost = pl.CostEstimate(
        flops=2 * B * d_in_pad * d_out_pad,
        transcendentals=B * d_out_pad,
        bytes_accessed=(B * d_in_pad * in_itemsize
                        + d_in_pad * d_out_pad * in_itemsize
                        + d_out_pad * 4
                        + B * d_out_pad * 4),
    )

    out_p = pl.pallas_call(
        lr_kernel,
        out_shape=jax.ShapeDtypeStruct((B, d_out_pad), jnp.float32),
        grid_spec=pltpu.PrefetchScalarGridSpec(
            num_scalar_prefetch=0,
            grid=grid,
            in_specs=[
                pl.BlockSpec((TM, TK), lambda i, k: (i, k)),           # x
                pl.BlockSpec((TK, d_out_pad), lambda i, k: (k, 0)),    # W (resident when TK == d_in_pad)
                pl.BlockSpec((1, d_out_pad), lambda i, k: (0, 0)),     # bias
            ],
            out_specs=pl.BlockSpec((TM, d_out_pad), lambda i, k: (i, 0)),
        ),
        compiler_params=pltpu.CompilerParams(
            dimension_semantics=("parallel", "arbitrary"),
            vmem_limit_bytes=vmem_limit,
        ),
        cost_estimate=cost,
    )(x_p, w_t_padded, b_padded)

    return out_p[:, :d_out]


if __name__ == "__main__":
    batch, input_dim, output_dim = 8, 32, 16

    key = jax.random.PRNGKey(0)
    kx, kw, kb = jax.random.split(key, 3)

    x = jax.random.normal(kx, (batch, input_dim), dtype=jnp.float32)
    # Deterministic init mimicking nn.Linear's uniform(-1/sqrt(fan_in), 1/sqrt(fan_in))
    bound = 1.0 / (input_dim ** 0.5)
    weight = jax.random.uniform(kw, (output_dim, input_dim),
                                minval=-bound, maxval=bound, dtype=jnp.float32)
    bias = jax.random.uniform(kb, (output_dim,),
                              minval=-bound, maxval=bound, dtype=jnp.float32)

    # One-time parameter prep (transpose + pad happen here, not per call).
    # TODO(synk): on v6e/v7x pass compute_dtype=jnp.bfloat16 here when model
    # tolerance allows (halves x/W HBM traffic, bf16-native MXU).
    w_t_p, b_p, d_out = prepare_lr_params(weight, bias)

    fwd = jax.jit(lr_forward, static_argnums=(3,))
    out = fwd(x, w_t_p, b_p, d_out)
    jax.block_until_ready(out)

    # Reference check (tolerance loosened for the EUP approx reciprocal).
    ref = jax.nn.sigmoid(x @ weight.T + bias)
    assert out.shape == (batch, output_dim)
    assert jnp.allclose(out, ref, atol=5e-3, rtol=5e-3), \
        float(jnp.max(jnp.abs(out - ref)))

    print("KERNEL_OK")
</pallas_src>

<mosaic_0001>
module attributes {stable_mosaic.version = 11 : i64} {
  func.func @lr_kernel(%arg0: i32, %arg1: i32, %arg2: memref<8x128xf32, #tpu.memory_space<vmem>>, %arg3: memref<128x128xf32, #tpu.memory_space<vmem>>, %arg4: memref<1x128xf32, #tpu.memory_space<vmem>>, %arg5: memref<8x128xf32, #tpu.memory_space<vmem>>) attributes {dimension_semantics = [#tpu.dimension_semantics<parallel>, #tpu.dimension_semantics<arbitrary>], iteration_bounds = array<i64: 1, 1>, scalar_prefetch = 0 : i64, scratch_operands = 0 : i64, tpu.core_type = #tpu.core_type<tc>, window_params = [{transform_indices = @transform_0, window_bounds = array<i64: 8, 128>}, {transform_indices = @transform_1, window_bounds = array<i64: 128, 128>}, {pipeline_mode = #tpu.pipeline_mode<synchronous>, transform_indices = @transform_2, window_bounds = array<i64: 1, 128>}, {transform_indices = @transform_3, window_bounds = array<i64: 8, 128>}]} {
    %c0_i32 = arith.constant 0 : i32
    %0 = arith.cmpi eq, %arg1, %c0_i32 : i32
    %1 = arith.extui %0 : i1 to i32
    %c0_i32_0 = arith.constant 0 : i32
    %2 = arith.cmpi ne, %1, %c0_i32_0 : i32
    scf.if %2 {
      %c0_10 = arith.constant 0 : index
      %c0_11 = arith.constant 0 : index
      %12 = vector.load %arg4[%c0_10, %c0_11] : memref<1x128xf32, #tpu.memory_space<vmem>>, vector<1x128xf32>
      %13 = vector.shape_cast %12 : vector<1x128xf32> to vector<1x128xf32>
      %14 = vector.broadcast %13 : vector<1x128xf32> to vector<8x128xf32>
      %c0_12 = arith.constant 0 : index
      %c0_13 = arith.constant 0 : index
      %15 = vector.load %arg5[%c0_12, %c0_13] : memref<8x128xf32, #tpu.memory_space<vmem>>, vector<8x128xf32>
      tpu.vector_store %arg5[%c0_12, %c0_13], %14 {strides = array<i32>} : memref<8x128xf32, #tpu.memory_space<vmem>>, vector<8x128xf32>,
    } else {
    }
    %c0 = arith.constant 0 : index
    %c0_1 = arith.constant 0 : index
    %3 = vector.load %arg5[%c0, %c0_1] : memref<8x128xf32, #tpu.memory_space<vmem>>, vector<8x128xf32>
    %c0_2 = arith.constant 0 : index
    %c0_3 = arith.constant 0 : index
    %4 = vector.load %arg2[%c0_2, %c0_3] : memref<8x128xf32, #tpu.memory_space<vmem>>, vector<8x128xf32>
    %c0_4 = arith.constant 0 : index
    %c0_5 = arith.constant 0 : index
    %5 = vector.load %arg3[%c0_4, %c0_5] : memref<128x128xf32, #tpu.memory_space<vmem>>, vector<128x128xf32>
    %cst = arith.constant dense<0.000000e+00> : vector<8x128xf32>
    %6 = tpu.matmul %4, %5, %cst {dimension_numbers = #tpu.dot_dimension_numbers<[1], [0], [0], [1], [0, 0, 1, 1], [], []>} : vector<8x128xf32>, vector<128x128xf32>, vector<8x128xf32> -> vector<8x128xf32>
    %7 = arith.addf %3, %6 : vector<8x128xf32>
    %c0_6 = arith.constant 0 : index
    %c0_7 = arith.constant 0 : index
    %8 = vector.load %arg5[%c0_6, %c0_7] : memref<8x128xf32, #tpu.memory_space<vmem>>, vector<8x128xf32>
    tpu.vector_store %arg5[%c0_6, %c0_7], %7 {strides = array<i32>} : memref<8x128xf32, #tpu.memory_space<vmem>>, vector<8x128xf32>,
    %c0_i32_8 = arith.constant 0 : i32
    %9 = arith.cmpi eq, %arg1, %c0_i32_8 : i32
    %10 = arith.extui %9 : i1 to i32
    %c0_i32_9 = arith.constant 0 : i32
    %11 = arith.cmpi ne, %10, %c0_i32_9 : i32
    scf.if %11 {
      %c0_10 = arith.constant 0 : index
      %c0_11 = arith.constant 0 : index
      %12 = vector.load %arg5[%c0_10, %c0_11] : memref<8x128xf32, #tpu.memory_space<vmem>>, vector<8x128xf32>
      %cst_12 = arith.constant 0.000000e+00 : f32
      %13 = vector.broadcast %cst_12 : f32 to vector<8x128xf32>
      %14 = arith.subf %13, %12 : vector<8x128xf32>
      %15 = math.exp %14 : vector<8x128xf32>
      %cst_13 = arith.constant 1.000000e+00 : f32
      %16 = vector.broadcast %cst_13 : f32 to vector<8x128xf32>
      %17 = arith.addf %16, %15 : vector<8x128xf32>
      %18 = tpu.reciprocal %17 {approx = true} : vector<8x128xf32> -> vector<8x128xf32>
      %c0_14 = arith.constant 0 : index
      %c0_15 = arith.constant 0 : index
      %19 = vector.load %arg5[%c0_14, %c0_15] : memref<8x128xf32, #tpu.memory_space<vmem>>, vector<8x128xf32>
      tpu.vector_store %arg5[%c0_14, %c0_15], %18 {strides = array<i32>} : memref<8x128xf32, #tpu.memory_space<vmem>>, vector<8x128xf32>,
    } else {
    }
    return
  }
  func.func @transform_0(%arg0: i32, %arg1: i32) -> (i32, i32) {
    %c0_i32 = arith.constant 0 : i32
    return %arg0, %arg1 : i32, i32
  }
  func.func @transform_1(%arg0: i32, %arg1: i32) -> (i32, i32) {
    %c0_i32 = arith.constant 0 : i32
    %c0_i32_0 = arith.constant 0 : i32
    return %arg1, %c0_i32 : i32, i32
  }
  func.func @transform_2(%arg0: i32, %arg1: i32) -> (i32, i32) {
    %c0_i32 = arith.constant 0 : i32
    %c0_i32_0 = arith.constant 0 : i32
    %c0_i32_1 = arith.constant 0 : i32
    return %c0_i32, %c0_i32_0 : i32, i32
  }
  func.func @transform_3(%arg0: i32, %arg1: i32) -> (i32, i32) {
    %c0_i32 = arith.constant 0 : i32
    %c0_i32_0 = arith.constant 0 : i32
    return %arg0, %c0_i32 : i32, i32
  }
}

</mosaic_0001>

<llo_original>
// kernel: lr_forward.1
$region0: #{lr_forward.1}
  #allocation0 [shape = 'u32[]', space=smem, size = 0x4, offset = 0x4, fixed_abs, tag = 'smem constant byte address 0x4 - core index']
  #allocation1 [shape = 'u32[144,128]{1,0:T(1,128)}', space=vmem, size = 0x12000, scoped, tag = 'internal scratch']
  %s0 = inlined_call_operand.vmem [shape: f32[8,128], index: 0, kind: input, shape index: {}]
  %s1 = inlined_call_operand.hbm [shape: f32[128,128], index: 1, kind: input, shape index: {}]
  %s2 = inlined_call_operand.vmem [shape: f32[1,128], index: 2, kind: input, shape index: {}]
  %s3 = inlined_call_operand.hbm [shape: f32[8,128], index: 3, kind: output, shape index: {}]
  %s4 = sld [smem:[#allocation0]]
  $region34: #{lr_forward.1} parent=0
    _
  %s6 = ssub.s32 1, %s4
  %s7 = scalar_select 0, %s6, %s4
  $region1: #{lr_forward.1} parent=0
    #allocation2 [shape = 'u8[65536]{0}', space=vmem, size = 0x10000, scoped, tag = 'input window, operand 1, single buffered']
    #allocation3 [shape = 's32[1]{0}', space=sflag, size = 0x4, scoped, tag = 'scoped memory for lr_forward.1']
    #allocation4 [shape = 's32[1]{0}', space=sflag, size = 0x4, scoped, tag = 'scoped memory for lr_forward.1']
    #allocation5 [shape = 'u8[4096]{0}', space=vmem, size = 0x1000, scoped, tag = 'output window, operand 0, single buffered']
    %8 = vsyncpa [#allocation3], 0
    %9 = vsyncpa [#allocation4], 0
    // Predicated region
    $region2: #{lr_forward.1} parent=1 // pred_check
      _
    $region3: #{lr_forward.1} parent=1 // pred_check_branch
      %11 = sbr.rel (0) target = $region5
    $region4: #{lr_forward.1} parent=1 // pred_region
      _
    $region5: #{lr_forward.1} parent=1 // pred_fallthru
      _
    // Predicated region
    $region6: #{lr_forward.1} parent=1 // pred_check
      _
    $region7: #{lr_forward.1} parent=1 // pred_check_branch
      %13 = sbr.rel (0) target = $region9
    $region8: #{lr_forward.1} parent=1 // pred_region
      %s15 = ssub.s32 2048, 2048
      %16 = vsyncadd [#allocation3], %s15
      %s17 = sshll.u32 [#allocation2], 4
      %s18 = int_to_ptr.vmem [resolvable:$true] %s17
      %23 = dma.hbm_to_vmem [thread:$0]  %s1, 2048, %s18, [#allocation3], 128, 128, 8
    $region9: #{lr_forward.1} parent=1 // pred_fallthru
      _
    // Predicated region
    $region10: #{lr_forward.1} parent=1 // pred_check
      _
    $region11: #{lr_forward.1} parent=1 // pred_check_branch
      %25 = sbr.rel (0) target = $region13
    $region12: #{lr_forward.1} parent=1 // pred_region
      _
    $region13: #{lr_forward.1} parent=1 // pred_fallthru
      _
    // Predicated region
    $region14: #{lr_forward.1} parent=1 // pred_check
      _
    $region15: #{lr_forward.1} parent=1 // pred_check_branch
      %27 = sbr.rel (0) target = $region17
    $region16: #{lr_forward.1} parent=1 // pred_region
      %28 = dma.done [#allocation3], 2048
    $region17: #{lr_forward.1} parent=1 // pred_fallthru
      _
    %p29 = scmp.eq.s32.totalorder 0, 0
    // Predicated region
    $region18: #{lr_forward.1} parent=1 // pred_check
      %p30 = pneg %p29
    $region19: #{lr_forward.1} parent=1 // pred_check_branch
      %32 = sbr.rel (%p30) target = $region21
    $region20: #{lr_forward.1} parent=1 // pred_region
      %v33 = vld [vmem:[%s2] sm:$0x1]
      %v35 = vlaneseq
      %v36 = vshrl.u32 %v35, 7
      %v37 = vsub.s32 0, %v36
      %v38 = vrot.slane %v33, %v37
      %40 = vst [vmem:[#allocation5] sm:$0xff] %v38
    $region21: #{lr_forward.1} parent=1 // pred_fallthru
      _
    %v41 = vld [vmem:[#allocation5] sm:$0xff]
    %v42 = vld [vmem:[%s0] sm:$0xff]
    %v43 = vld [vmem:[#allocation2] sm:$0xff]
    %v44 = vld [vmem:[#allocation2 + $0x8] sm:$0xff]
    %v45 = vld [vmem:[#allocation2 + $0x10] sm:$0xff]
    %v46 = vld [vmem:[#allocation2 + $0x18] sm:$0xff]
    %v47 = vld [vmem:[#allocation2 + $0x20] sm:$0xff]
    %v48 = vld [vmem:[#allocation2 + $0x28] sm:$0xff]
    %v49 = vld [vmem:[#allocation2 + $0x30] sm:$0xff]
    %v50 = vld [vmem:[#allocation2 + $0x38] sm:$0xff]
    %v51 = vld [vmem:[#allocation2 + $0x40] sm:$0xff]
    %v52 = vld [vmem:[#allocation2 + $0x48] sm:$0xff]
    %v53 = vld [vmem:[#allocation2 + $0x50] sm:$0xff]
    %v54 = vld [vmem:[#allocation2 + $0x58] sm:$0xff]
    %v55 = vld [vmem:[#allocation2 + $0x60] sm:$0xff]
    %v56 = vld [vmem:[#allocation2 + $0x68] sm:$0xff]
    %v57 = vld [vmem:[#allocation2 + $0x70] sm:$0xff]
    %v58 = vld [vmem:[#allocation2 + $0x78] sm:$0xff]
    %59 = vmatprep.subr.mxu0 0.0
    %60 = vmatpush1.msra.mxu0 %v43
    %61 = vmatprep.subr.mxu0 0.0
    %62 = vmatpush1.msra.mxu0 %v44
    %63 = vmatprep.subr.mxu0 0.0
    %64 = vmatpush1.msra.mxu0 %v45
    %65 = vmatprep.subr.mxu0 0.0
    %66 = vmatpush1.msra.mxu0 %v46
    %67 = vmatprep.subr.mxu0 0.0
    %68 = vmatpush1.msra.mxu0 %v47
    %69 = vmatprep.subr.mxu0 0.0
    %70 = vmatpush1.msra.mxu0 %v48
    %71 = vmatprep.subr.mxu0 0.0
    %72 = vmatpush1.msra.mxu0 %v49
    %73 = vmatprep.subr.mxu0 0.0
    %74 = vmatpush1.msra.mxu0 %v50
    %75 = vmatprep.subr.mxu0 0.0
    %76 = vmatpush1.msra.mxu0 %v51
    %77 = vmatprep.subr.mxu0 0.0
    %78 = vmatpush1.msra.mxu0 %v52
    %79 = vmatprep.subr.mxu0 0.0
    %80 = vmatpush1.msra.mxu0 %v53
    %81 = vmatprep.subr.mxu0 0.0
    %82 = vmatpush1.msra.mxu0 %v54
    %83 = vmatprep.subr.mxu0 0.0
    %84 = vmatpush1.msra.mxu0 %v55
    %85 = vmatprep.subr.mxu0 0.0
    %86 = vmatpush1.msra.mxu0 %v56
    %87 = vmatprep.subr.mxu0 0.0
    %88 = vmatpush1.msra.mxu0 %v57
    %89 = vmatprep.subr.mxu0 0.0
    %90 = vmatpush1.msra.mxu0 %v58
    %91 = vmatprep.subr.mxu0 0.0
    %92 = vmatpush1.msra.mxu0 0.0
    %93 = vmatprep.subr.mxu0 0.0
    %94 = vmatpush1.msra.mxu0 0.0
    %95 = vmatprep.subr.mxu0 0.0
    %96 = vmatpush1.msra.mxu0 0.0
    %97 = vmatprep.subr.mxu0 0.0
    %98 = vmatpush1.msra.mxu0 0.0
    %99 = vmatprep.subr.mxu0 0.0
    %100 = vmatpush1.msra.mxu0 0.0
    %101 = vmatprep.subr.mxu0 0.0
    %102 = vmatpush1.msra.mxu0 0.0
    %103 = vmatprep.subr.mxu0 0.0
    %104 = vmatpush1.msra.mxu0 0.0
    %105 = vmatprep.subr.mxu0 0.0
    %106 = vmatpush1.msra.mxu0 0.0
    %107 = vmatprep.subr.mxu0 0.0
    %108 = vmatpush1.msra.mxu0 0.0
    %109 = vmatprep.subr.mxu0 0.0
    %110 = vmatpush1.msra.mxu0 0.0
    %111 = vmatprep.subr.mxu0 0.0
    %112 = vmatpush1.msra.mxu0 0.0
    %113 = vmatprep.subr.mxu0 0.0
    %114 = vmatpush1.msra.mxu0 0.0
    %115 = vmatprep.subr.mxu0 0.0
    %116 = vmatpush1.msra.mxu0 0.0
    %117 = vmatprep.subr.mxu0 0.0
    %118 = vmatpush1.msra.mxu0 0.0
    %119 = vmatprep.subr.mxu0 0.0
    %120 = vmatpush1.msra.mxu0 0.0
    %121 = vmatprep.subr.mxu0 0.0
    %122 = vmatpush1.msra.mxu0 0.0
    %123 = vmatprep.mubr.f32.mxu0 0.0
    %124 = vmatmul.mubr.f32.gmra.mrb[0].mxu0 %v42
    %v125 = vpop.f32.mrb[0].mxu0
    %v126 = vadd.f32 0.0, %v125
    %v127 = vpop.f32.mrb[0].mxu0
    %128 = vdwg.mxu0
    %v129 = vadd.f32 %v41, %v126
    %130 = vst [vmem:[#allocation5] sm:$0xff] %v129
    // Predicated region
    $region22: #{lr_forward.1} parent=1 // pred_check
      %p131 = pneg %p29
    $region23: #{lr_forward.1} parent=1 // pred_check_branch
      %133 = sbr.rel (%p131) target = $region25
    $region24: #{lr_forward.1} parent=1 // pred_region
      %v134 = vld [vmem:[#allocation5] sm:$0xff]
      %v135 = vsub.f32 0.0, %v134
      %v136 = vmul.f32 %v135, 1.442695
      %v137 = vpow.pop %v136
      %v138 = vadd.f32 %v137, 1.0
      %v139 = vrcp.pop %v138
      %140 = vst [vmem:[#allocation5] sm:$0xff] %v139
    $region25: #{lr_forward.1} parent=1 // pred_fallthru
      _
    // Predicated region
    $region26: #{lr_forward.1} parent=1 // pred_check
      _
    $region27: #{lr_forward.1} parent=1 // pred_check_branch
      %142 = sbr.rel (0) target = $region29
    $region28: #{lr_forward.1} parent=1 // pred_region
      %s144 = ssub.s32 128, 128
      %145 = vsyncadd [#allocation4], %s144
      %s147 = sshll.u32 [#allocation5], 4
      %s148 = int_to_ptr.vmem [resolvable:$true] %s147
      %150 = dma.vmem_to_hbm [thread:$0]  %s148, 128, %s3, [#allocation4]
    $region29: #{lr_forward.1} parent=1 // pred_fallthru
      _
    // Predicated region
    $region30: #{lr_forward.1} parent=1 // pred_check
      _
    $region31: #{lr_forward.1} parent=1 // pred_check_branch
      %152 = sbr.rel (0) target = $region33
    $region32: #{lr_forward.1} parent=1 // pred_region
      %153 = dma.done [#allocation4], 128
    $region33: #{lr_forward.1} parent=1 // pred_fallthru
      _
    %154 = vsyncpa [#allocation3], 1
    %155 = vsyncpa [#allocation4], 1

</llo_original>
